<compile_context>
chip_gen: v5e
topology: v5e:2x2
jax: 0.10.0
libtpu: 0.0.40
codegen_flags: <defaults>
</compile_context>

<pallas_src>
import numpy as np

import jax
import jax.numpy as jnp
from jax.experimental import pallas as pl
from jax.experimental.pallas import tpu as pltpu

EPS = 1e-5


# -----------------------------------------------------------------------------
# Kernel: the whole forward pass, one pallas_call, activations stay in vregs.
# -----------------------------------------------------------------------------
def net_kernel(x_ref, m1_ref, m2_ref, m9_ref, m10_ref,
               p192_ref, p48_ref, b10_ref, p1_ref, p2_ref, out_ref):
    f32 = jnp.float32

    def bn_relu(a, pool_ref, gamma_row, beta_row):
        # a: (n, C*HW), channel-major lanes.
        # pool_ref: (C*HW, C*HW) constant channel-pooling matrix with 1/count
        # folded in, so  a_colsum @ pool  == per-lane channel mean.
        cs = jnp.sum(a, axis=0, keepdims=True)                       # (1, C*HW)
        css = jnp.sum(a * a, axis=0, keepdims=True)                  # (1, C*HW)
        mean_v = jnp.dot(cs, pool_ref[...], preferred_element_type=f32)
        ex2_v = jnp.dot(css, pool_ref[...], preferred_element_type=f32)
        var_v = jnp.maximum(ex2_v - mean_v * mean_v, 0.0)
        scale = gamma_row * jax.lax.rsqrt(var_v + EPS)
        shift = beta_row - mean_v * scale
        return jnp.maximum(a * scale + shift, 0.0)

    x = x_ref[...]                                                    # (n, 256)

    # conv1 (Conv2d 1->3, 5x5, s2, p2) as one MXU matmul, + bias row.
    a1 = jnp.dot(x, m1_ref[...], preferred_element_type=f32) + p192_ref[0:1, :]
    # bm + relu (batch stats over n*8*8 per channel; count folded into p1).
    a1 = bn_relu(a1, p1_ref, p192_ref[1:2, :], p192_ref[2:3, :])      # (n, 192)

    # conv2 (Conv2d 3->3, 5x5, s2, p2) as one MXU matmul, + bias row.
    a2 = jnp.dot(a1, m2_ref[...], preferred_element_type=f32) + p48_ref[0:1, :]
    # bm + relu (batch stats over n*4*4 per channel).
    a2 = bn_relu(a2, p2_ref, p48_ref[1:2, :], p48_ref[2:3, :])        # (n, 48)

    # conv9 (ConvTranspose2d 3->3, 2x2, s2) + relu.
    a3 = jnp.maximum(
        jnp.dot(a2, m9_ref[...], preferred_element_type=f32) + p192_ref[3:4, :],
        0.0)                                                          # (n, 192)

    # conv10 (ConvTranspose2d 3->2, 2x2, s2) + relu; single unmasked store.
    y = jnp.dot(a3, m10_ref[...], preferred_element_type=f32) + b10_ref[...]
    out_ref[...] = jnp.maximum(y, 0.0)                                # (n, 512)


# -----------------------------------------------------------------------------
# Wrapper-side weight layout plumbing (no activation compute here).
# -----------------------------------------------------------------------------
def conv2d_matrix(w, h_in, w_in, stride, pad):
    """Conv2d weights (Cout,Cin,kh,kw) -> dense (Cin*Hin*Win, Cout*Hout*Wout)."""
    cout, cin, kh, kw = w.shape
    h_out = (h_in + 2 * pad - kh) // stride + 1
    w_out = (w_in + 2 * pad - kw) // stride + 1
    rows, cols, widx = [], [], []
    for co in range(cout):
        for ci in range(cin):
            for i in range(h_out):
                for j in range(w_out):
                    for dh in range(kh):
                        for dw in range(kw):
                            r = i * stride + dh - pad
                            c = j * stride + dw - pad
                            if 0 <= r < h_in and 0 <= c < w_in:
                                rows.append((ci * h_in + r) * w_in + c)
                                cols.append((co * h_out + i) * w_out + j)
                                widx.append(((co * cin + ci) * kh + dh) * kw + dw)
    vals = w.reshape(-1)[np.asarray(widx)]
    m = jnp.zeros((cin * h_in * w_in, cout * h_out * w_out), jnp.float32)
    return m.at[np.asarray(rows), np.asarray(cols)].set(vals.astype(jnp.float32))


def convT2d_matrix(w, h_in, w_in, stride):
    """ConvTranspose2d weights (Cin,Cout,k,k), stride=k, pad=0 -> dense matrix."""
    cin, cout, kh, kw = w.shape
    h_out = (h_in - 1) * stride + kh
    w_out = (w_in - 1) * stride + kw
    rows, cols, widx = [], [], []
    for ci in range(cin):
        for co in range(cout):
            for i in range(h_in):
                for j in range(w_in):
                    for p in range(kh):
                        for q in range(kw):
                            r = i * stride + p
                            c = j * stride + q
                            rows.append((ci * h_in + i) * w_in + j)
                            cols.append((co * h_out + r) * w_out + c)
                            widx.append(((ci * cout + co) * kh + p) * kw + q)
    vals = w.reshape(-1)[np.asarray(widx)]
    m = jnp.zeros((cin * h_in * w_in, cout * h_out * w_out), jnp.float32)
    return m.at[np.asarray(rows), np.asarray(cols)].set(vals.astype(jnp.float32))


def channel_pool_matrix(n_ch, px, count):
    """(n_ch*px, n_ch*px) block matrix: 1/count inside each channel block."""
    p = np.kron(np.eye(n_ch, dtype=np.float32), np.ones((px, px), np.float32))
    return jnp.asarray(p / np.float32(count), jnp.float32)


def net_forward(x, params):
    n, cin, h, w = x.shape
    assert (cin, h, w) == (1, 16, 16)
    f32 = jnp.float32

    # Per-layer structured-dense weight matrices (weight scatter only).
    m1 = conv2d_matrix(params["w1"], 16, 16, 2, 2)     # (256, 192)
    m2 = conv2d_matrix(params["w2"], 8, 8, 2, 2)       # (192,  48)
    m9 = convT2d_matrix(params["w9"], 4, 4, 2)         # ( 48, 192)
    m10 = convT2d_matrix(params["w10"], 8, 8, 2)       # (192, 512)

    # Pre-broadcast bias / BN-affine rows (channel-major lanes).
    p192 = jnp.stack([jnp.repeat(params["b1"], 64),
                      jnp.repeat(params["bn_g"], 64),
                      jnp.repeat(params["bn_b"], 64),
                      jnp.repeat(params["b9"], 64)], axis=0).astype(f32)   # (4,192)
    p48 = jnp.stack([jnp.repeat(params["b2"], 16),
                     jnp.repeat(params["bn_g"], 16),
                     jnp.repeat(params["bn_b"], 16)], axis=0).astype(f32)  # (3,48)
    b10 = jnp.repeat(params["b10"], 256).reshape(1, 512).astype(f32)       # (1,512)

    # Constant channel-pooling matrices with 1/count folded in.
    p1 = channel_pool_matrix(3, 64, n * 64)            # BN after conv1: n*8*8
    p2 = channel_pool_matrix(3, 16, n * 16)            # BN after conv2: n*4*4

    x_flat = x.reshape(n, 256).astype(f32)             # lane-dense input

    vmem = pl.BlockSpec(memory_space=pltpu.MemorySpace.VMEM)
    out = pl.pallas_call(
        net_kernel,
        out_shape=jax.ShapeDtypeStruct((n, 512), f32),
        in_specs=[vmem] * 10,
        out_specs=vmem,
    )(x_flat, m1, m2, m9, m10, p192, p48, b10, p1, p2)

    # Output lanes are already (co, row, col) row-major -> plain reshape.
    return out.reshape(n, 2, 16, 16)


# -----------------------------------------------------------------------------
# Pure-JAX reference (direct conv / convT / batch-stats BN) for verification.
# -----------------------------------------------------------------------------
def reference_forward(x, params):
    def conv2d(x, w, b, stride, pad):
        nn, cin, H, W = x.shape
        cout, _, k, _ = w.shape
        Ho = (H + 2 * pad - k) // stride + 1
        Wo = (W + 2 * pad - k) // stride + 1
        xp = jnp.pad(x, ((0, 0), (0, 0), (pad, pad), (pad, pad)))
        out = jnp.zeros((nn, cout, Ho, Wo), jnp.float32)
        for dh in range(k):
            for dw in range(k):
                patch = xp[:, :, dh:dh + stride * Ho:stride, dw:dw + stride * Wo:stride]
                out = out + jnp.einsum("ncij,oc->noij", patch, w[:, :, dh, dw])
        return out + b[None, :, None, None]

    def convT2d(x, w, b, stride):
        nn, cin, H, W = x.shape
        cout, k = w.shape[1], w.shape[2]
        out = jnp.zeros((nn, cout, (H - 1) * stride + k, (W - 1) * stride + k),
                        jnp.float32)
        for p in range(k):
            for q in range(k):
                contrib = jnp.einsum("ncij,co->noij", x, w[:, :, p, q])
                out = out.at[:, :, p::stride, q::stride].add(contrib)
        return out + b[None, :, None, None]

    def bn(x, g, b):
        mean = jnp.mean(x, axis=(0, 2, 3), keepdims=True)
        var = jnp.mean(jnp.square(x - mean), axis=(0, 2, 3), keepdims=True)
        return ((x - mean) * jax.lax.rsqrt(var + EPS)
                * g[None, :, None, None] + b[None, :, None, None])

    h = jax.nn.relu(bn(conv2d(x, params["w1"], params["b1"], 2, 2),
                       params["bn_g"], params["bn_b"]))
    h = jax.nn.relu(bn(conv2d(h, params["w2"], params["b2"], 2, 2),
                       params["bn_g"], params["bn_b"]))
    h = jax.nn.relu(convT2d(h, params["w9"], params["b9"], 2))
    h = jax.nn.relu(convT2d(h, params["w10"], params["b10"], 2))
    return h


def init_params(key):
    ks = jax.random.split(key, 8)
    return {
        # Conv2d(1, 3, 5, 2, 2): weight (Cout, Cin, kH, kW)
        "w1": 0.1 * jax.random.normal(ks[0], (3, 1, 5, 5), jnp.float32),
        "b1": 0.1 * jax.random.normal(ks[1], (3,), jnp.float32),
        # Conv2d(3, 3, 5, 2, 2)
        "w2": 0.1 * jax.random.normal(ks[2], (3, 3, 5, 5), jnp.float32),
        "b2": 0.1 * jax.random.normal(ks[3], (3,), jnp.float32),
        # ConvTranspose2d(3, 3, 2, 2): weight (Cin, Cout, kH, kW)
        "w9": 0.1 * jax.random.normal(ks[4], (3, 3, 2, 2), jnp.float32),
        "b9": 0.1 * jax.random.normal(ks[5], (3,), jnp.float32),
        # ConvTranspose2d(3, 2, 2, 2)
        "w10": 0.1 * jax.random.normal(ks[6], (3, 2, 2, 2), jnp.float32),
        "b10": 0.1 * jax.random.normal(ks[7], (2,), jnp.float32),
        # BatchNorm2d(3): shared affine params for both `bm` applications
        "bn_g": jnp.array([1.0, 1.1, 0.9], jnp.float32),
        "bn_b": jnp.array([0.05, -0.05, 0.0], jnp.float32),
    }


if __name__ == "__main__":
    key = jax.random.PRNGKey(0)
    k_param, k_in = jax.random.split(key)
    params = init_params(k_param)

    # Input: NCHW; Conv2d(1, ...) implies 1 input channel.
    x = jax.random.normal(k_in, (2, 1, 16, 16), jnp.float32)

    out = jax.jit(net_forward)(x, params)
    out = jax.block_until_ready(out)

    ref = jax.jit(reference_forward)(x, params)
    ref = jax.block_until_ready(ref)

    assert out.shape == (2, 2, 16, 16), out.shape
    assert out.dtype == jnp.float32
    assert bool(jnp.all(jnp.isfinite(out)))
    assert bool(jnp.all(out >= 0.0))  # final ReLU
    max_err = float(jnp.max(jnp.abs(out - ref)))
    assert max_err < 1e-3, f"mismatch vs reference: max abs err = {max_err}"

    print("KERNEL_OK")
</pallas_src>

<mosaic_0001>
module attributes {stable_mosaic.version = 11 : i64} {
  func.func @net_kernel(%arg0: memref<2x256xf32, #tpu.memory_space<vmem>>, %arg1: memref<256x192xf32, #tpu.memory_space<vmem>>, %arg2: memref<192x48xf32, #tpu.memory_space<vmem>>, %arg3: memref<48x192xf32, #tpu.memory_space<vmem>>, %arg4: memref<192x512xf32, #tpu.memory_space<vmem>>, %arg5: memref<4x192xf32, #tpu.memory_space<vmem>>, %arg6: memref<3x48xf32, #tpu.memory_space<vmem>>, %arg7: memref<1x512xf32, #tpu.memory_space<vmem>>, %arg8: memref<192x192xf32, #tpu.memory_space<vmem>>, %arg9: memref<48x48xf32, #tpu.memory_space<vmem>>, %arg10: memref<2x512xf32, #tpu.memory_space<vmem>>) attributes {dimension_semantics = [], scalar_prefetch = 0 : i64, scratch_operands = 0 : i64, tpu.core_type = #tpu.core_type<tc>} {
    %c0 = arith.constant 0 : index
    %c0_0 = arith.constant 0 : index
    %0 = vector.load %arg0[%c0, %c0_0] : memref<2x256xf32, #tpu.memory_space<vmem>>, vector<2x256xf32>
    %c0_1 = arith.constant 0 : index
    %c0_2 = arith.constant 0 : index
    %1 = vector.load %arg1[%c0_1, %c0_2] : memref<256x192xf32, #tpu.memory_space<vmem>>, vector<256x192xf32>
    %cst = arith.constant dense<0.000000e+00> : vector<2x192xf32>
    %2 = tpu.matmul %0, %1, %cst {dimension_numbers = #tpu.dot_dimension_numbers<[1], [0], [0], [1], [0, 0, 1, 1], [], []>} : vector<2x256xf32>, vector<256x192xf32>, vector<2x192xf32> -> vector<2x192xf32>
    %c0_3 = arith.constant 0 : index
    %c0_4 = arith.constant 0 : index
    %3 = vector.load %arg5[%c0_3, %c0_4] : memref<4x192xf32, #tpu.memory_space<vmem>>, vector<1x192xf32>
    %4 = vector.broadcast %3 : vector<1x192xf32> to vector<2x192xf32>
    %5 = arith.addf %2, %4 : vector<2x192xf32>
    %c1 = arith.constant 1 : index
    %c0_5 = arith.constant 0 : index
    %6 = vector.load %arg5[%c1, %c0_5] : memref<4x192xf32, #tpu.memory_space<vmem>>, vector<1x192xf32>
    %c2 = arith.constant 2 : index
    %c0_6 = arith.constant 0 : index
    %7 = vector.load %arg5[%c2, %c0_6] : memref<4x192xf32, #tpu.memory_space<vmem>>, vector<1x192xf32>
    %cst_7 = arith.constant dense<0.000000e+00> : vector<192xf32>
    %8 = vector.multi_reduction <add>, %5, %cst_7 [0] : vector<2x192xf32> to vector<192xf32>
    %9 = vector.shape_cast %8 : vector<192xf32> to vector<1x192xf32>
    %10 = arith.mulf %5, %5 : vector<2x192xf32>
    %cst_8 = arith.constant dense<0.000000e+00> : vector<192xf32>
    %11 = vector.multi_reduction <add>, %10, %cst_8 [0] : vector<2x192xf32> to vector<192xf32>
    %12 = vector.shape_cast %11 : vector<192xf32> to vector<1x192xf32>
    %c0_9 = arith.constant 0 : index
    %c0_10 = arith.constant 0 : index
    %13 = vector.load %arg8[%c0_9, %c0_10] : memref<192x192xf32, #tpu.memory_space<vmem>>, vector<192x192xf32>
    %cst_11 = arith.constant dense<0.000000e+00> : vector<1x192xf32>
    %14 = tpu.matmul %9, %13, %cst_11 {dimension_numbers = #tpu.dot_dimension_numbers<[1], [0], [0], [1], [0, 0, 1, 1], [], []>} : vector<1x192xf32>, vector<192x192xf32>, vector<1x192xf32> -> vector<1x192xf32>
    %c0_12 = arith.constant 0 : index
    %c0_13 = arith.constant 0 : index
    %15 = vector.load %arg8[%c0_12, %c0_13] : memref<192x192xf32, #tpu.memory_space<vmem>>, vector<192x192xf32>
    %cst_14 = arith.constant dense<0.000000e+00> : vector<1x192xf32>
    %16 = tpu.matmul %12, %15, %cst_14 {dimension_numbers = #tpu.dot_dimension_numbers<[1], [0], [0], [1], [0, 0, 1, 1], [], []>} : vector<1x192xf32>, vector<192x192xf32>, vector<1x192xf32> -> vector<1x192xf32>
    %17 = arith.mulf %14, %14 : vector<1x192xf32>
    %18 = arith.subf %16, %17 : vector<1x192xf32>
    %cst_15 = arith.constant 0.000000e+00 : f32
    %19 = vector.broadcast %cst_15 : f32 to vector<1x192xf32>
    %20 = arith.maximumf %18, %19 : vector<1x192xf32>
    %cst_16 = arith.constant 9.99999974E-6 : f32
    %21 = vector.broadcast %cst_16 : f32 to vector<1x192xf32>
    %22 = arith.addf %20, %21 : vector<1x192xf32>
    %23 = math.rsqrt %22 : vector<1x192xf32>
    %24 = arith.mulf %6, %23 : vector<1x192xf32>
    %25 = arith.mulf %14, %24 : vector<1x192xf32>
    %26 = arith.subf %7, %25 : vector<1x192xf32>
    %27 = vector.broadcast %24 : vector<1x192xf32> to vector<2x192xf32>
    %28 = arith.mulf %5, %27 : vector<2x192xf32>
    %29 = vector.broadcast %26 : vector<1x192xf32> to vector<2x192xf32>
    %30 = arith.addf %28, %29 : vector<2x192xf32>
    %cst_17 = arith.constant 0.000000e+00 : f32
    %31 = vector.broadcast %cst_17 : f32 to vector<2x192xf32>
    %32 = arith.maximumf %30, %31 : vector<2x192xf32>
    %c0_18 = arith.constant 0 : index
    %c0_19 = arith.constant 0 : index
    %33 = vector.load %arg2[%c0_18, %c0_19] : memref<192x48xf32, #tpu.memory_space<vmem>>, vector<192x48xf32>
    %cst_20 = arith.constant dense<0.000000e+00> : vector<2x48xf32>
    %34 = tpu.matmul %32, %33, %cst_20 {dimension_numbers = #tpu.dot_dimension_numbers<[1], [0], [0], [1], [0, 0, 1, 1], [], []>} : vector<2x192xf32>, vector<192x48xf32>, vector<2x48xf32> -> vector<2x48xf32>
    %c0_21 = arith.constant 0 : index
    %c0_22 = arith.constant 0 : index
    %35 = vector.load %arg6[%c0_21, %c0_22] : memref<3x48xf32, #tpu.memory_space<vmem>>, vector<1x48xf32>
    %36 = vector.broadcast %35 : vector<1x48xf32> to vector<2x48xf32>
    %37 = arith.addf %34, %36 : vector<2x48xf32>
    %c1_23 = arith.constant 1 : index
    %c0_24 = arith.constant 0 : index
    %38 = vector.load %arg6[%c1_23, %c0_24] : memref<3x48xf32, #tpu.memory_space<vmem>>, vector<1x48xf32>
    %c2_25 = arith.constant 2 : index
    %c0_26 = arith.constant 0 : index
    %39 = vector.load %arg6[%c2_25, %c0_26] : memref<3x48xf32, #tpu.memory_space<vmem>>, vector<1x48xf32>
    %cst_27 = arith.constant dense<0.000000e+00> : vector<48xf32>
    %40 = vector.multi_reduction <add>, %37, %cst_27 [0] : vector<2x48xf32> to vector<48xf32>
    %41 = vector.shape_cast %40 : vector<48xf32> to vector<1x48xf32>
    %42 = arith.mulf %37, %37 : vector<2x48xf32>
    %cst_28 = arith.constant dense<0.000000e+00> : vector<48xf32>
    %43 = vector.multi_reduction <add>, %42, %cst_28 [0] : vector<2x48xf32> to vector<48xf32>
    %44 = vector.shape_cast %43 : vector<48xf32> to vector<1x48xf32>
    %c0_29 = arith.constant 0 : index
    %c0_30 = arith.constant 0 : index
    %45 = vector.load %arg9[%c0_29, %c0_30] : memref<48x48xf32, #tpu.memory_space<vmem>>, vector<48x48xf32>
    %cst_31 = arith.constant dense<0.000000e+00> : vector<1x48xf32>
    %46 = tpu.matmul %41, %45, %cst_31 {dimension_numbers = #tpu.dot_dimension_numbers<[1], [0], [0], [1], [0, 0, 1, 1], [], []>} : vector<1x48xf32>, vector<48x48xf32>, vector<1x48xf32> -> vector<1x48xf32>
    %c0_32 = arith.constant 0 : index
    %c0_33 = arith.constant 0 : index
    %47 = vector.load %arg9[%c0_32, %c0_33] : memref<48x48xf32, #tpu.memory_space<vmem>>, vector<48x48xf32>
    %cst_34 = arith.constant dense<0.000000e+00> : vector<1x48xf32>
    %48 = tpu.matmul %44, %47, %cst_34 {dimension_numbers = #tpu.dot_dimension_numbers<[1], [0], [0], [1], [0, 0, 1, 1], [], []>} : vector<1x48xf32>, vector<48x48xf32>, vector<1x48xf32> -> vector<1x48xf32>
    %49 = arith.mulf %46, %46 : vector<1x48xf32>
    %50 = arith.subf %48, %49 : vector<1x48xf32>
    %cst_35 = arith.constant 0.000000e+00 : f32
    %51 = vector.broadcast %cst_35 : f32 to vector<1x48xf32>
    %52 = arith.maximumf %50, %51 : vector<1x48xf32>
    %cst_36 = arith.constant 9.99999974E-6 : f32
    %53 = vector.broadcast %cst_36 : f32 to vector<1x48xf32>
    %54 = arith.addf %52, %53 : vector<1x48xf32>
    %55 = math.rsqrt %54 : vector<1x48xf32>
    %56 = arith.mulf %38, %55 : vector<1x48xf32>
    %57 = arith.mulf %46, %56 : vector<1x48xf32>
    %58 = arith.subf %39, %57 : vector<1x48xf32>
    %59 = vector.broadcast %56 : vector<1x48xf32> to vector<2x48xf32>
    %60 = arith.mulf %37, %59 : vector<2x48xf32>
    %61 = vector.broadcast %58 : vector<1x48xf32> to vector<2x48xf32>
    %62 = arith.addf %60, %61 : vector<2x48xf32>
    %cst_37 = arith.constant 0.000000e+00 : f32
    %63 = vector.broadcast %cst_37 : f32 to vector<2x48xf32>
    %64 = arith.maximumf %62, %63 : vector<2x48xf32>
    %c0_38 = arith.constant 0 : index
    %c0_39 = arith.constant 0 : index
    %65 = vector.load %arg3[%c0_38, %c0_39] : memref<48x192xf32, #tpu.memory_space<vmem>>, vector<48x192xf32>
    %cst_40 = arith.constant dense<0.000000e+00> : vector<2x192xf32>
    %66 = tpu.matmul %64, %65, %cst_40 {dimension_numbers = #tpu.dot_dimension_numbers<[1], [0], [0], [1], [0, 0, 1, 1], [], []>} : vector<2x48xf32>, vector<48x192xf32>, vector<2x192xf32> -> vector<2x192xf32>
    %c3 = arith.constant 3 : index
    %c0_41 = arith.constant 0 : index
    %67 = vector.load %arg5[%c3, %c0_41] : memref<4x192xf32, #tpu.memory_space<vmem>>, vector<1x192xf32>
    %68 = vector.broadcast %67 : vector<1x192xf32> to vector<2x192xf32>
    %69 = arith.addf %66, %68 : vector<2x192xf32>
    %cst_42 = arith.constant 0.000000e+00 : f32
    %70 = vector.broadcast %cst_42 : f32 to vector<2x192xf32>
    %71 = arith.maximumf %69, %70 : vector<2x192xf32>
    %c0_43 = arith.constant 0 : index
    %c0_44 = arith.constant 0 : index
    %72 = vector.load %arg4[%c0_43, %c0_44] : memref<192x512xf32, #tpu.memory_space<vmem>>, vector<192x512xf32>
    %cst_45 = arith.constant dense<0.000000e+00> : vector<2x512xf32>
    %73 = tpu.matmul %71, %72, %cst_45 {dimension_numbers = #tpu.dot_dimension_numbers<[1], [0], [0], [1], [0, 0, 1, 1], [], []>} : vector<2x192xf32>, vector<192x512xf32>, vector<2x512xf32> -> vector<2x512xf32>
    %c0_46 = arith.constant 0 : index
    %c0_47 = arith.constant 0 : index
    %74 = vector.load %arg7[%c0_46, %c0_47] : memref<1x512xf32, #tpu.memory_space<vmem>>, vector<1x512xf32>
    %75 = vector.broadcast %74 : vector<1x512xf32> to vector<2x512xf32>
    %76 = arith.addf %73, %75 : vector<2x512xf32>
    %cst_48 = arith.constant 0.000000e+00 : f32
    %77 = vector.broadcast %cst_48 : f32 to vector<2x512xf32>
    %78 = arith.maximumf %76, %77 : vector<2x512xf32>
    %c0_49 = arith.constant 0 : index
    %c0_50 = arith.constant 0 : index
    %79 = vector.load %arg10[%c0_49, %c0_50] : memref<2x512xf32, #tpu.memory_space<vmem>>, vector<2x512xf32>
    tpu.vector_store %arg10[%c0_49, %c0_50], %78 {strides = array<i32>} : memref<2x512xf32, #tpu.memory_space<vmem>>, vector<2x512xf32>,
    return
  }
}

</mosaic_0001>

<llo_original>
// kernel: net_forward.1
$region0: #{net_forward.1}
  #allocation0 [shape = 'u32[]', space=smem, size = 0x4, offset = 0x4, fixed_abs, tag = 'smem constant byte address 0x4 - core index']
  #allocation1 [shape = 'u32[72,128]{1,0:T(1,128)}', space=vmem, size = 0x9000, scoped, tag = 'internal scratch']
  %s0 = inlined_call_operand.vmem [shape: f32[2,256], index: 0, kind: input, shape index: {}]
  %s1 = inlined_call_operand.vmem [shape: f32[256,192], index: 1, kind: input, shape index: {}]
  %s2 = inlined_call_operand.vmem [shape: f32[192,48], index: 2, kind: input, shape index: {}]
  %s3 = inlined_call_operand.vmem [shape: f32[48,192], index: 3, kind: input, shape index: {}]
  %s4 = inlined_call_operand.vmem [shape: f32[192,512], index: 4, kind: input, shape index: {}]
  %s5 = inlined_call_operand.vmem [shape: f32[4,192], index: 5, kind: input, shape index: {}]
  %s6 = inlined_call_operand.vmem [shape: f32[3,48], index: 6, kind: input, shape index: {}]
  %s7 = inlined_call_operand.vmem [shape: f32[1,512], index: 7, kind: input, shape index: {}]
  %s8 = inlined_call_operand.vmem [shape: f32[192,192], index: 8, kind: input, shape index: {}]
  %s9 = inlined_call_operand.vmem [shape: f32[48,48], index: 9, kind: input, shape index: {}]
  %s10 = inlined_call_operand.vmem [shape: f32[2,512], index: 10, kind: output, shape index: {}]
  %s11 = sld [smem:[#allocation0]]
  $region50: #{net_forward.1} parent=0
    _
  %s13 = ssub.s32 1, %s11
  %s14 = scalar_select 0, %s13, %s11
  // Predicated region
  $region2: #{net_forward.1} parent=0 // pred_check
    _
  $region3: #{net_forward.1} parent=0 // pred_check_branch
    %16 = sbr.rel (0) target = $region5
  $region4: #{net_forward.1} parent=0 // pred_region
    _
  $region5: #{net_forward.1} parent=0 // pred_fallthru
    _
  // Predicated region
  $region6: #{net_forward.1} parent=0 // pred_check
    _
  $region7: #{net_forward.1} parent=0 // pred_check_branch
    %18 = sbr.rel (0) target = $region9
  $region8: #{net_forward.1} parent=0 // pred_region
    _
  $region9: #{net_forward.1} parent=0 // pred_fallthru
    _
  // Predicated region
  $region10: #{net_forward.1} parent=0 // pred_check
    _
  $region11: #{net_forward.1} parent=0 // pred_check_branch
    %20 = sbr.rel (0) target = $region13
  $region12: #{net_forward.1} parent=0 // pred_region
    _
  $region13: #{net_forward.1} parent=0 // pred_fallthru
    _
  // Predicated region
  $region14: #{net_forward.1} parent=0 // pred_check
    _
  $region15: #{net_forward.1} parent=0 // pred_check_branch
    %22 = sbr.rel (0) target = $region17
  $region16: #{net_forward.1} parent=0 // pred_region
    _
  $region17: #{net_forward.1} parent=0 // pred_fallthru
    _
  // Predicated region
  $region18: #{net_forward.1} parent=0 // pred_check
    _
  $region19: #{net_forward.1} parent=0 // pred_check_branch
    %24 = sbr.rel (0) target = $region21
  $region20: #{net_forward.1} parent=0 // pred_region
    _
  $region21: #{net_forward.1} parent=0 // pred_fallthru
    _
  // Predicated region
  $region22: #{net_forward.1} parent=0 // pred_check
    _
  $region23: #{net_forward.1} parent=0 // pred_check_branch
    %26 = sbr.rel (0) target = $region25
  $region24: #{net_forward.1} parent=0 // pred_region
    _
  $region25: #{net_forward.1} parent=0 // pred_fallthru
    _
  // Predicated region
  $region26: #{net_forward.1} parent=0 // pred_check
    _
  $region27: #{net_forward.1} parent=0 // pred_check_branch
    %28 = sbr.rel (0) target = $region29
  $region28: #{net_forward.1} parent=0 // pred_region
    _
  $region29: #{net_forward.1} parent=0 // pred_fallthru
    _
  // Predicated region
  $region30: #{net_forward.1} parent=0 // pred_check
    _
  $region31: #{net_forward.1} parent=0 // pred_check_branch
    %30 = sbr.rel (0) target = $region33
  $region32: #{net_forward.1} parent=0 // pred_region
    _
  $region33: #{net_forward.1} parent=0 // pred_fallthru
    _
  // Predicated region
  $region34: #{net_forward.1} parent=0 // pred_check
    _
  $region35: #{net_forward.1} parent=0 // pred_check_branch
    %32 = sbr.rel (0) target = $region37
  $region36: #{net_forward.1} parent=0 // pred_region
    _
  $region37: #{net_forward.1} parent=0 // pred_fallthru
    _
  // Predicated region
  $region38: #{net_forward.1} parent=0 // pred_check
    _
  $region39: #{net_forward.1} parent=0 // pred_check_branch
    %34 = sbr.rel (0) target = $region41
  $region40: #{net_forward.1} parent=0 // pred_region
    _
  $region41: #{net_forward.1} parent=0 // pred_fallthru
    _
  %v35 = vld [vmem:[%s0] sm:$0xf]
  %v36 = vld [vmem:[%s1] sm:$0xff]
  %v37 = vld [vmem:[%s1 + $0x8] sm:$0xff]
  %v38 = vld [vmem:[%s1 + $0x10] sm:$0xff]
  %v39 = vld [vmem:[%s1 + $0x18] sm:$0xff]
  %v40 = vld [vmem:[%s1 + $0x20] sm:$0xff]
  %v41 = vld [vmem:[%s1 + $0x28] sm:$0xff]
  %v42 = vld [vmem:[%s1 + $0x30] sm:$0xff]
  %v43 = vld [vmem:[%s1 + $0x38] sm:$0xff]
  %v44 = vld [vmem:[%s1 + $0x40] sm:$0xff]
  %v45 = vld [vmem:[%s1 + $0x48] sm:$0xff]
  %v46 = vld [vmem:[%s1 + $0x50] sm:$0xff]
  %v47 = vld [vmem:[%s1 + $0x58] sm:$0xff]
  %v48 = vld [vmem:[%s1 + $0x60] sm:$0xff]
  %v49 = vld [vmem:[%s1 + $0x68] sm:$0xff]
  %v50 = vld [vmem:[%s1 + $0x70] sm:$0xff]
  %v51 = vld [vmem:[%s1 + $0x78] sm:$0xff]
  %v52 = vld [vmem:[%s1 + $0x80] sm:$0xff]
  %v53 = vld [vmem:[%s1 + $0x88] sm:$0xff]
  %v54 = vld [vmem:[%s1 + $0x90] sm:$0xff]
  %v55 = vld [vmem:[%s1 + $0x98] sm:$0xff]
  %v56 = vld [vmem:[%s1 + $0xa0] sm:$0xff]
  %v57 = vld [vmem:[%s1 + $0xa8] sm:$0xff]
  %v58 = vld [vmem:[%s1 + $0xb0] sm:$0xff]
  %v59 = vld [vmem:[%s1 + $0xb8] sm:$0xff]
  %v60 = vld [vmem:[%s1 + $0xc0] sm:$0xff]
  %v61 = vld [vmem:[%s1 + $0xc8] sm:$0xff]
  %v62 = vld [vmem:[%s1 + $0xd0] sm:$0xff]
  %v63 = vld [vmem:[%s1 + $0xd8] sm:$0xff]
  %v64 = vld [vmem:[%s1 + $0xe0] sm:$0xff]
  %v65 = vld [vmem:[%s1 + $0xe8] sm:$0xff]
  %v66 = vld [vmem:[%s1 + $0xf0] sm:$0xff]
  %v67 = vld [vmem:[%s1 + $0xf8] sm:$0xff]
  %v68 = vld [vmem:[%s1 + $0x100] sm:$0xff]
  %v69 = vld [vmem:[%s1 + $0x108] sm:$0xff]
  %v70 = vld [vmem:[%s1 + $0x110] sm:$0xff]
  %v71 = vld [vmem:[%s1 + $0x118] sm:$0xff]
  %v72 = vld [vmem:[%s1 + $0x120] sm:$0xff]
  %v73 = vld [vmem:[%s1 + $0x128] sm:$0xff]
  %v74 = vld [vmem:[%s1 + $0x130] sm:$0xff]
  %v75 = vld [vmem:[%s1 + $0x138] sm:$0xff]
  %v76 = vld [vmem:[%s1 + $0x140] sm:$0xff]
  %v77 = vld [vmem:[%s1 + $0x148] sm:$0xff]
  %v78 = vld [vmem:[%s1 + $0x150] sm:$0xff]
  %v79 = vld [vmem:[%s1 + $0x158] sm:$0xff]
  %v80 = vld [vmem:[%s1 + $0x160] sm:$0xff]
  %v81 = vld [vmem:[%s1 + $0x168] sm:$0xff]
  %v82 = vld [vmem:[%s1 + $0x170] sm:$0xff]
  %v83 = vld [vmem:[%s1 + $0x178] sm:$0xff]
  %v84 = vld [vmem:[%s1 + $0x180] sm:$0xff]
  %v85 = vld [vmem:[%s1 + $0x188] sm:$0xff]
  %v86 = vld [vmem:[%s1 + $0x190] sm:$0xff]
  %v87 = vld [vmem:[%s1 + $0x198] sm:$0xff]
  %v88 = vld [vmem:[%s1 + $0x1a0] sm:$0xff]
  %v89 = vld [vmem:[%s1 + $0x1a8] sm:$0xff]
  %v90 = vld [vmem:[%s1 + $0x1b0] sm:$0xff]
  %v91 = vld [vmem:[%s1 + $0x1b8] sm:$0xff]
  %v92 = vld [vmem:[%s1 + $0x1c0] sm:$0xff]
  %v93 = vld [vmem:[%s1 + $0x1c8] sm:$0xff]
  %v94 = vld [vmem:[%s1 + $0x1d0] sm:$0xff]
  %v95 = vld [vmem:[%s1 + $0x1d8] sm:$0xff]
  %v96 = vld [vmem:[%s1 + $0x1e0] sm:$0xff]
  %v97 = vld [vmem:[%s1 + $0x1e8] sm:$0xff]
  %v98 = vld [vmem:[%s1 + $0x1f0] sm:$0xff]
  %v99 = vld [vmem:[%s1 + $0x1f8] sm:$0xff]
  %v100 = vld [vmem:[%s5] ss:$4 sm:$0x3]
  %v102 = vperm.slane %v100, 0
  %v103 = vperm.slane %v100, 1
  %107 = vst [vmem:[#allocation1] ss:$4 sm:$0xff] %v35
  %v108 = vld.sshfl [vmem:[#allocation1] sm:$0xff pattern:$0x73625140]
  %v109 = vld.sshfl [vmem:[#allocation1 + $0x8] sm:$0xff pattern:$0x73625140]
  %112 = vmatpush.msra.mxu0 %v66
  %113 = vmatpush.msra.mxu0 %v64
  %114 = vmatpush.msra.mxu0 %v62
  %115 = vmatpush.msra.mxu0 %v60
  %116 = vmatpush.msra.mxu0 %v58
  %117 = vmatpush.msra.mxu0 %v56
  %118 = vmatpush.msra.mxu0 %v54
  %119 = vmatpush.msra.mxu0 %v52
  %120 = vmatpush.msra.mxu0 %v50
  %121 = vmatpush.msra.mxu0 %v48
  %122 = vmatpush.msra.mxu0 %v46
  %123 = vmatpush.msra.mxu0 %v44
  %124 = vmatpush.msra.mxu0 %v42
  %125 = vmatpush.msra.mxu0 %v40
  %126 = vmatpush.msra.mxu0 %v38
  %127 = vmatpush.msra.mxu0 %v36
  %128 = vmatmul.f32.gmra.mxu0 %v108
  %v129 = vpop.f32.mrf.mxu0
  %v130 = vadd.f32 %v102, %v129
  %131 = vdwg.mxu0
  %132 = vmatpush.msra.mxu0 %v98
  %133 = vmatpush.msra.mxu0 %v96
  %134 = vmatpush.msra.mxu0 %v94
  %135 = vmatpush.msra.mxu0 %v92
  %136 = vmatpush.msra.mxu0 %v90
  %137 = vmatpush.msra.mxu0 %v88
  %138 = vmatpush.msra.mxu0 %v86
  %139 = vmatpush.msra.mxu0 %v84
  %140 = vmatpush.msra.mxu0 %v82
  %141 = vmatpush.msra.mxu0 %v80
  %142 = vmatpush.msra.mxu0 %v78
  %143 = vmatpush.msra.mxu0 %v76
  %144 = vmatpush.msra.mxu0 %v74
  %145 = vmatpush.msra.mxu0 %v72
  %146 = vmatpush.msra.mxu0 %v70
  %147 = vmatpush.msra.mxu0 %v68
  %148 = vmatmul.f32.gmra.mxu0 %v109
  %v149 = vpop.f32.mrf.mxu0
  %v150 = vadd.f32 %v130, %v149
  %151 = vdwg.mxu0
  %152 = vmatpush.msra.mxu0 %v67
  %153 = vmatpush.msra.mxu0 %v65
  %154 = vmatpush.msra.mxu0 %v63
  %155 = vmatpush.msra.mxu0 %v61
  %156 = vmatpush.msra.mxu0 %v59
  %157 = vmatpush.msra.mxu0 %v57
  %158 = vmatpush.msra.mxu0 %v55
  %159 = vmatpush.msra.mxu0 %v53
  %160 = vmatpush.msra.mxu0 %v51
  %161 = vmatpush.msra.mxu0 %v49
  %162 = vmatpush.msra.mxu0 %v47
  %163 = vmatpush.msra.mxu0 %v45
  %164 = vmatpush.msra.mxu0 %v43
  %165 = vmatpush.msra.mxu0 %v41
  %166 = vmatpush.msra.mxu0 %v39
  %167 = vmatpush.msra.mxu0 %v37
  %168 = vmatmul.f32.gmra.mxu0 %v108
  %v169 = vpop.f32.mrf.mxu0
  %v170 = vadd.f32 %v103, %v169
  %171 = vdwg.mxu0
  %172 = vmatpush.msra.mxu0 %v99
  %173 = vmatpush.msra.mxu0 %v97
  %174 = vmatpush.msra.mxu0 %v95
  %175 = vmatpush.msra.mxu0 %v93
  %176 = vmatpush.msra.mxu0 %v91
  %177 = vmatpush.msra.mxu0 %v89
  %178 = vmatpush.msra.mxu0 %v87
  %179 = vmatpush.msra.mxu0 %v85
  %180 = vmatpush.msra.mxu0 %v83
  %181 = vmatpush.msra.mxu0 %v81
  %182 = vmatpush.msra.mxu0 %v79
  %183 = vmatpush.msra.mxu0 %v77
  %184 = vmatpush.msra.mxu0 %v75
  %185 = vmatpush.msra.mxu0 %v73
  %186 = vmatpush.msra.mxu0 %v71
  %187 = vmatpush.msra.mxu0 %v69
  %188 = vmatmul.f32.gmra.mxu0 %v109
  %v189 = vpop.f32.mrf.mxu0
  %v190 = vadd.f32 %v170, %v189
  %191 = vdwg.mxu0
  %s192 = scalar_lea.vmem %s5, 1
  %v193 = vld [vmem:[%s192] ss:$4 sm:$0x3]
  %s194 = scalar_lea.vmem %s5, 2
  %v195 = vld [vmem:[%s194] ss:$4 sm:$0x3]
  %vm196 = vcmask 1041408
  %v197 = vsel %vm196, %v150, 0.0
  %v198 = vrot.slane %v197, 4
  %v199 = vadd.f32 %v197, %v198
  %v200 = vrot.slane %v199, 2
  %v201 = vadd.f32 %v199, %v200
  %v202 = vrot.slane %v201, 1
  %v203 = vadd.f32 %v201, %v202
  %vm204 = vcmask 517120
  %v205 = vsel %vm204, %v190, 0.0
  %v206 = vrot.slane %v205, 4
  %v207 = vadd.f32 %v205, %v206
  %v208 = vrot.slane %v207, 2
  %v209 = vadd.f32 %v207, %v208
  %v210 = vrot.slane %v209, 1
  %v211 = vadd.f32 %v209, %v210
  %v212 = vmul.f32 %v150, %v150
  %v213 = vmul.f32 %v190, %v190
  %v214 = vsel %vm196, %v212, 0.0
  %v215 = vrot.slane %v214, 4
  %v216 = vadd.f32 %v214, %v215
  %v217 = vrot.slane %v216, 2
  %v218 = vadd.f32 %v216, %v217
  %v219 = vrot.slane %v218, 1
  %v220 = vadd.f32 %v218, %v219
  %v221 = vsel %vm204, %v213, 0.0
  %v222 = vrot.slane %v221, 4
  %v223 = vadd.f32 %v221, %v222
  %v224 = vrot.slane %v223, 2
  %v225 = vadd.f32 %v223, %v224
  %v226 = vrot.slane %v225, 1
  %v227 = vadd.f32 %v225, %v226
  %v228 = vld [vmem:[%s8] sm:$0xff]
  %v229 = vld [vmem:[%s8 + $0x8] sm:$0xff]
  %v230 = vld [vmem:[%s8 + $0x10] sm:$0xff]
  %v231 = vld [vmem:[%s8 + $0x18] sm:$0xff]
  %v232 = vld [vmem:[%s8 + $0x20] sm:$0xff]
  %v233 = vld [vmem:[%s8 + $0x28] sm:$0xff]
  %v234 = vld [vmem:[%s8 + $0x30] sm:$0xff]
  %v235 = vld [vmem:[%s8 + $0x38] sm:$0xff]
  %v236 = vld [vmem:[%s8 + $0x40] sm:$0xff]
  %v237 = vld [vmem:[%s8 + $0x48] sm:$0xff]
  %v238 = vld [vmem:[%s8 + $0x50] sm:$0xff]
  %v239 = vld [vmem:[%s8 + $0x58] sm:$0xff]
  %v240 = vld [vmem:[%s8 + $0x60] sm:$0xff]
  %v241 = vld [vmem:[%s8 + $0x68] sm:$0xff]
  %v242 = vld [vmem:[%s8 + $0x70] sm:$0xff]
  %v243 = vld [vmem:[%s8 + $0x78] sm:$0xff]
  %v244 = vld [vmem:[%s8 + $0x80] sm:$0xff]
  %v245 = vld [vmem:[%s8 + $0x88] sm:$0xff]
  %v246 = vld [vmem:[%s8 + $0x90] sm:$0xff]
  %v247 = vld [vmem:[%s8 + $0x98] sm:$0xff]
  %v248 = vld [vmem:[%s8 + $0xa0] sm:$0xff]
  %v249 = vld [vmem:[%s8 + $0xa8] sm:$0xff]
  %v250 = vld [vmem:[%s8 + $0xb0] sm:$0xff]
  %v251 = vld [vmem:[%s8 + $0xb8] sm:$0xff]
  %v252 = vld [vmem:[%s8 + $0xc0] sm:$0xff]
  %v253 = vld [vmem:[%s8 + $0xc8] sm:$0xff]
  %v254 = vld [vmem:[%s8 + $0xd0] sm:$0xff]
  %v255 = vld [vmem:[%s8 + $0xd8] sm:$0xff]
  %v256 = vld [vmem:[%s8 + $0xe0] sm:$0xff]
  %v257 = vld [vmem:[%s8 + $0xe8] sm:$0xff]
  %v258 = vld [vmem:[%s8 + $0xf0] sm:$0xff]
  %v259 = vld [vmem:[%s8 + $0xf8] sm:$0xff]
  %v260 = vld [vmem:[%s8 + $0x100] sm:$0xff]
  %v261 = vld [vmem:[%s8 + $0x108] sm:$0xff]
  %v262 = vld [vmem:[%s8 + $0x110] sm:$0xff]
  %v263 = vld [vmem:[%s8 + $0x118] sm:$0xff]
  %v264 = vld [vmem:[%s8 + $0x120] sm:$0xff]
  %v265 = vld [vmem:[%s8 + $0x128] sm:$0xff]
  %v266 = vld [vmem:[%s8 + $0x130] sm:$0xff]
  %v267 = vld [vmem:[%s8 + $0x138] sm:$0xff]
  %v268 = vld [vmem:[%s8 + $0x140] sm:$0xff]
  %v269 = vld [vmem:[%s8 + $0x148] sm:$0xff]
  %v270 = vld [vmem:[%s8 + $0x150] sm:$0xff]
  %v271 = vld [vmem:[%s8 + $0x158] sm:$0xff]
  %v272 = vld [vmem:[%s8 + $0x160] sm:$0xff]
  %v273 = vld [vmem:[%s8 + $0x168] sm:$0xff]
  %v274 = vld [vmem:[%s8 + $0x170] sm:$0xff]
  %v275 = vld [vmem:[%s8 + $0x178] sm:$0xff]
  %vm276 = vcmask 523264
  %v278 = vsel %vm276, %v211, 0
  %280 = vmatpush.msra.mxu0 %v258
  %281 = vmatpush.msra.mxu0 %v256
  %282 = vmatpush.msra.mxu0 %v254
  %283 = vmatpush.msra.mxu0 %v252
  %284 = vmatpush.msra.mxu0 %v250
  %285 = vmatpush.msra.mxu0 %v248
  %286 = vmatpush.msra.mxu0 %v246
  %287 = vmatpush.msra.mxu0 %v244
  %288 = vmatpush.msra.mxu0 %v242
  %289 = vmatpush.msra.mxu0 %v240
  %290 = vmatpush.msra.mxu0 %v238
  %291 = vmatpush.msra.mxu0 %v236
  %292 = vmatpush.msra.mxu0 %v234
  %293 = vmatpush.msra.mxu0 %v232
  %294 = vmatpush.msra.mxu0 %v230
  %295 = vmatpush.msra.mxu0 %v228
  %296 = vmatmul.f32.gmra.mxu0 %v203
  %v297 = vpop.f32.mrf.mxu0
  %v298 = vadd.f32 0.0, %v297
  %299 = vdwg.mxu0
  %300 = vmatpush.msra.mxu0 0.0
  %301 = vmatpush.msra.mxu0 0.0
  %302 = vmatpush.msra.mxu0 0.0
  %303 = vmatpush.msra.mxu0 0.0
  %304 = vmatpush.msra.mxu0 0.0
  %305 = vmatpush.msra.mxu0 0.0
  %306 = vmatpush.msra.mxu0 0.0
  %307 = vmatpush.msra.mxu0 0.0
  %308 = vmatpush.msra.mxu0 %v274
  %309 = vmatpush.msra.mxu0 %v272
  %310 = vmatpush.msra.mxu0 %v270
  %311 = vmatpush.msra.mxu0 %v268
  %312 = vmatpush.msra.mxu0 %v266
  %313 = vmatpush.msra.mxu0 %v264
  %314 = vmatpush.msra.mxu0 %v262
  %315 = vmatpush.msra.mxu0 %v260
  %316 = vmatmul.f32.gmra.mxu0 %v278
  %v317 = vpop.f32.mrf.mxu0
  %v318 = vadd.f32 %v298, %v317
  %319 = vdwg.mxu0
  %320 = vmatpush.msra.mxu0 %v259
  %321 = vmatpush.msra.mxu0 %v257
  %322 = vmatpush.msra.mxu0 %v255
  %323 = vmatpush.msra.mxu0 %v253
  %324 = vmatpush.msra.mxu0 %v251
  %325 = vmatpush.msra.mxu0 %v249
  %326 = vmatpush.msra.mxu0 %v247
  %327 = vmatpush.msra.mxu0 %v245
  %328 = vmatpush.msra.mxu0 %v243
  %329 = vmatpush.msra.mxu0 %v241
  %330 = vmatpush.msra.mxu0 %v239
  %331 = vmatpush.msra.mxu0 %v237
  %332 = vmatpush.msra.mxu0 %v235
  %333 = vmatpush.msra.mxu0 %v233
  %334 = vmatpush.msra.mxu0 %v231
  %335 = vmatpush.msra.mxu0 %v229
  %336 = vmatmul.f32.gmra.mxu0 %v203
  %v337 = vpop.f32.mrf.mxu0
  %v338 = vadd.f32 0.0, %v337
  %339 = vdwg.mxu0
  %340 = vmatpush.msra.mxu0 0.0
  %341 = vmatpush.msra.mxu0 0.0
  %342 = vmatpush.msra.mxu0 0.0
  %343 = vmatpush.msra.mxu0 0.0
  %344 = vmatpush.msra.mxu0 0.0
  %345 = vmatpush.msra.mxu0 0.0
  %346 = vmatpush.msra.mxu0 0.0
  %347 = vmatpush.msra.mxu0 0.0
  %348 = vmatpush.msra.mxu0 %v275
  %349 = vmatpush.msra.mxu0 %v273
  %350 = vmatpush.msra.mxu0 %v271
  %351 = vmatpush.msra.mxu0 %v269
  %352 = vmatpush.msra.mxu0 %v267
  %353 = vmatpush.msra.mxu0 %v265
  %354 = vmatpush.msra.mxu0 %v263
  %355 = vmatpush.msra.mxu0 %v261
  %356 = vmatmul.f32.gmra.mxu0 %v278
  %v357 = vpop.f32.mrf.mxu0
  %v358 = vadd.f32 %v338, %v357
  %359 = vdwg.mxu0
  %v361 = vsel %vm276, %v227, 0
  %363 = vmatpush.msra.mxu0 %v258
  %364 = vmatpush.msra.mxu0 %v256
  %365 = vmatpush.msra.mxu0 %v254
  %366 = vmatpush.msra.mxu0 %v252
  %367 = vmatpush.msra.mxu0 %v250
  %368 = vmatpush.msra.mxu0 %v248
  %369 = vmatpush.msra.mxu0 %v246
  %370 = vmatpush.msra.mxu0 %v244
  %371 = vmatpush.msra.mxu0 %v242
  %372 = vmatpush.msra.mxu0 %v240
  %373 = vmatpush.msra.mxu0 %v238
  %374 = vmatpush.msra.mxu0 %v236
  %375 = vmatpush.msra.mxu0 %v234
  %376 = vmatpush.msra.mxu0 %v232
  %377 = vmatpush.msra.mxu0 %v230
  %378 = vmatpush.msra.mxu0 %v228
  %379 = vmatmul.f32.gmra.mxu0 %v220
  %v380 = vpop.f32.mrf.mxu0
  %v381 = vadd.f32 0.0, %v380
  %382 = vdwg.mxu0
  %383 = vmatpush.msra.mxu0 0.0
  %384 = vmatpush.msra.mxu0 0.0
  %385 = vmatpush.msra.mxu0 0.0
  %386 = vmatpush.msra.mxu0 0.0
  %387 = vmatpush.msra.mxu0 0.0
  %388 = vmatpush.msra.mxu0 0.0
  %389 = vmatpush.msra.mxu0 0.0
  %390 = vmatpush.msra.mxu0 0.0
  %391 = vmatpush.msra.mxu0 %v274
  %392 = vmatpush.msra.mxu0 %v272
  %393 = vmatpush.msra.mxu0 %v270
  %394 = vmatpush.msra.mxu0 %v268
  %395 = vmatpush.msra.mxu0 %v266
  %396 = vmatpush.msra.mxu0 %v264
  %397 = vmatpush.msra.mxu0 %v262
  %398 = vmatpush.msra.mxu0 %v260
  %399 = vmatmul.f32.gmra.mxu0 %v361
  %v400 = vpop.f32.mrf.mxu0
  %v401 = vadd.f32 %v381, %v400
  %402 = vdwg.mxu0
  %403 = vmatpush.msra.mxu0 %v259
  %404 = vmatpush.msra.mxu0 %v257
  %405 = vmatpush.msra.mxu0 %v255
  %406 = vmatpush.msra.mxu0 %v253
  %407 = vmatpush.msra.mxu0 %v251
  %408 = vmatpush.msra.mxu0 %v249
  %409 = vmatpush.msra.mxu0 %v247
  %410 = vmatpush.msra.mxu0 %v245
  %411 = vmatpush.msra.mxu0 %v243
  %412 = vmatpush.msra.mxu0 %v241
  %413 = vmatpush.msra.mxu0 %v239
  %414 = vmatpush.msra.mxu0 %v237
  %415 = vmatpush.msra.mxu0 %v235
  %416 = vmatpush.msra.mxu0 %v233
  %417 = vmatpush.msra.mxu0 %v231
  %418 = vmatpush.msra.mxu0 %v229
  %419 = vmatmul.f32.gmra.mxu0 %v220
  %v420 = vpop.f32.mrf.mxu0
  %v421 = vadd.f32 0.0, %v420
  %422 = vdwg.mxu0
  %423 = vmatpush.msra.mxu0 0.0
  %424 = vmatpush.msra.mxu0 0.0
  %425 = vmatpush.msra.mxu0 0.0
  %426 = vmatpush.msra.mxu0 0.0
  %427 = vmatpush.msra.mxu0 0.0
  %428 = vmatpush.msra.mxu0 0.0
  %429 = vmatpush.msra.mxu0 0.0
  %430 = vmatpush.msra.mxu0 0.0
  %431 = vmatpush.msra.mxu0 %v275
  %432 = vmatpush.msra.mxu0 %v273
  %433 = vmatpush.msra.mxu0 %v271
  %434 = vmatpush.msra.mxu0 %v269
  %435 = vmatpush.msra.mxu0 %v267
  %436 = vmatpush.msra.mxu0 %v265
  %437 = vmatpush.msra.mxu0 %v263
  %438 = vmatpush.msra.mxu0 %v261
  %439 = vmatmul.f32.gmra.mxu0 %v361
  %v440 = vpop.f32.mrf.mxu0
  %v441 = vadd.f32 %v421, %v440
  %442 = vdwg.mxu0
  %v443 = vmul.f32 %v318, %v318
  %v444 = vmul.f32 %v358, %v358
  %v445 = vsub.f32 %v401, %v443
  %v446 = vsub.f32 %v441, %v444
  %v447 = vmax.f32 %v445, 0.0
  %v448 = vmax.f32 %v446, 0.0
  %v449 = vadd.f32 %v447, 1e-05
  %v450 = vadd.f32 %v448, 1e-05
  %v451 = vrsqrt.pop %v449
  %v452 = vmul.f32 %v451, %v449
  %v453 = vmul.f32 %v452, %v451
  %v454 = vmul.f32 0.5, %v453
  %v455 = vsub.f32 1.5, %v454
  %v456 = vmul.f32 %v451, %v455
  %vm457 = vweird.f32 %v449
  %vm458 = vweird.f32 %v451
  %vm459 = vmor %vm457, %vm458
  %v460 = vsel %vm459, %v451, %v456
  %v461 = vrsqrt.pop %v450
  %v462 = vmul.f32 %v461, %v450
  %v463 = vmul.f32 %v462, %v461
  %v464 = vmul.f32 0.5, %v463
  %v465 = vsub.f32 1.5, %v464
  %v466 = vmul.f32 %v461, %v465
  %vm467 = vweird.f32 %v450
  %vm468 = vweird.f32 %v461
  %vm469 = vmor %vm467, %vm468
  %v470 = vsel %vm469, %v461, %v466
  %v473 = vrot.slane %v470, 7
  %vm474 = vcmask 1040384
  %v475 = vsel %vm474, %v460, %v473
  %v477 = vmul.f32 %v193, %v475
  %v479 = vperm.slane %v477, 0
  %v480 = vperm.slane %v477, 1
  %v483 = vmul.f32 %v318, %v479
  %v484 = vmul.f32 %v358, %v480
  %v487 = vrot.slane %v484, 7
  %v488 = vsel %vm474, %v483, %v487
  %v490 = vsub.f32 %v195, %v488
  %v491 = vmul.f32 %v150, %v479
  %v492 = vmul.f32 %v190, %v480
  %v494 = vperm.slane %v490, 0
  %v495 = vperm.slane %v490, 1
  %v498 = vadd.f32 %v491, %v494
  %v499 = vadd.f32 %v492, %v495
  %v500 = vmax.f32 %v498, 0.0
  %v501 = vmax.f32 %v499, 0.0
  %v502 = vld [vmem:[%s2] sm:$0xff]
  %v503 = vld [vmem:[%s2 + $0x8] sm:$0xff]
  %v504 = vld [vmem:[%s2 + $0x10] sm:$0xff]
  %v505 = vld [vmem:[%s2 + $0x18] sm:$0xff]
  %v506 = vld [vmem:[%s2 + $0x20] sm:$0xff]
  %v507 = vld [vmem:[%s2 + $0x28] sm:$0xff]
  %v508 = vld [vmem:[%s2 + $0x30] sm:$0xff]
  %v509 = vld [vmem:[%s2 + $0x38] sm:$0xff]
  %v510 = vld [vmem:[%s2 + $0x40] sm:$0xff]
  %v511 = vld [vmem:[%s2 + $0x48] sm:$0xff]
  %v512 = vld [vmem:[%s2 + $0x50] sm:$0xff]
  %v513 = vld [vmem:[%s2 + $0x58] sm:$0xff]
  %v514 = vld [vmem:[%s2 + $0x60] sm:$0xff]
  %v515 = vld [vmem:[%s2 + $0x68] sm:$0xff]
  %v516 = vld [vmem:[%s2 + $0x70] sm:$0xff]
  %v517 = vld [vmem:[%s2 + $0x78] sm:$0xff]
  %v518 = vld [vmem:[%s2 + $0x80] sm:$0xff]
  %v519 = vld [vmem:[%s2 + $0x88] sm:$0xff]
  %v520 = vld [vmem:[%s2 + $0x90] sm:$0xff]
  %v521 = vld [vmem:[%s2 + $0x98] sm:$0xff]
  %v522 = vld [vmem:[%s2 + $0xa0] sm:$0xff]
  %v523 = vld [vmem:[%s2 + $0xa8] sm:$0xff]
  %v524 = vld [vmem:[%s2 + $0xb0] sm:$0xff]
  %v525 = vld [vmem:[%s2 + $0xb8] sm:$0xff]
  %v526 = vld [vmem:[%s6] sm:$0x1]
  %v527 = vperm.slane %v526, 0
  %v529 = vsel %vm276, %v501, 0
  %531 = vmatpush.msra.mxu0 %v517
  %532 = vmatpush.msra.mxu0 %v516
  %533 = vmatpush.msra.mxu0 %v515
  %534 = vmatpush.msra.mxu0 %v514
  %535 = vmatpush.msra.mxu0 %v513
  %536 = vmatpush.msra.mxu0 %v512
  %537 = vmatpush.msra.mxu0 %v511
  %538 = vmatpush.msra.mxu0 %v510
  %539 = vmatpush.msra.mxu0 %v509
  %540 = vmatpush.msra.mxu0 %v508
  %541 = vmatpush.msra.mxu0 %v507
  %542 = vmatpush.msra.mxu0 %v506
  %543 = vmatpush.msra.mxu0 %v505
  %544 = vmatpush.msra.mxu0 %v504
  %545 = vmatpush.msra.mxu0 %v503
  %546 = vmatpush.msra.mxu0 %v502
  %547 = vmatmul.f32.gmra.mxu0 %v500
  %v548 = vpop.f32.mrf.mxu0
  %v549 = vadd.f32 %v527, %v548
  %550 = vdwg.mxu0
  %551 = vmatpush.msra.mxu0 0.0
  %552 = vmatpush.msra.mxu0 0.0
  %553 = vmatpush.msra.mxu0 0.0
  %554 = vmatpush.msra.mxu0 0.0
  %555 = vmatpush.msra.mxu0 0.0
  %556 = vmatpush.msra.mxu0 0.0
  %557 = vmatpush.msra.mxu0 0.0
  %558 = vmatpush.msra.mxu0 0.0
  %559 = vmatpush.msra.mxu0 %v525
  %560 = vmatpush.msra.mxu0 %v524
  %561 = vmatpush.msra.mxu0 %v523
  %562 = vmatpush.msra.mxu0 %v522
  %563 = vmatpush.msra.mxu0 %v521
  %564 = vmatpush.msra.mxu0 %v520
  %565 = vmatpush.msra.mxu0 %v519
  %566 = vmatpush.msra.mxu0 %v518
  %567 = vmatmul.f32.gmra.mxu0 %v529
  %v568 = vpop.f32.mrf.mxu0
  %v569 = vadd.f32 %v549, %v568
  %570 = vdwg.mxu0
  %v571 = vld [vmem:[%s6 + $0x1] sm:$0x1]
  %v572 = vld [vmem:[%s6 + $0x2] sm:$0x1]
  %vm573 = vcmask 386048
  %v574 = vsel %vm573, %v569, 0.0
  %v575 = vrot.slane %v574, 4
  %v576 = vadd.f32 %v574, %v575
  %v577 = vrot.slane %v576, 2
  %v578 = vadd.f32 %v576, %v577
  %v579 = vrot.slane %v578, 1
  %v580 = vadd.f32 %v578, %v579
  %v581 = vmul.f32 %v569, %v569
  %v582 = vsel %vm573, %v581, 0.0
  %v583 = vrot.slane %v582, 4
  %v584 = vadd.f32 %v582, %v583
  %v585 = vrot.slane %v584, 2
  %v586 = vadd.f32 %v584, %v585
  %v587 = vrot.slane %v586, 1
  %v588 = vadd.f32 %v586, %v587
  %v589 = vld [vmem:[%s9] sm:$0xff]
  %v590 = vld [vmem:[%s9 + $0x8] sm:$0xff]
  %v591 = vld [vmem:[%s9 + $0x10] sm:$0xff]
  %v592 = vld [vmem:[%s9 + $0x18] sm:$0xff]
  %v593 = vld [vmem:[%s9 + $0x20] sm:$0xff]
  %v594 = vld [vmem:[%s9 + $0x28] sm:$0xff]
  %vm595 = vcmask 392192
  %v597 = vsel %vm595, %v580, 0
  %599 = vmatpush.msra.mxu0 0.0
  %600 = vmatpush.msra.mxu0 0.0
  %601 = vmatpush.msra.mxu0 0.0
  %602 = vmatpush.msra.mxu0 0.0
  %603 = vmatpush.msra.mxu0 0.0
  %604 = vmatpush.msra.mxu0 0.0
  %605 = vmatpush.msra.mxu0 0.0
  %606 = vmatpush.msra.mxu0 0.0
  %607 = vmatpush.msra.mxu0 0.0
  %608 = vmatpush.msra.mxu0 0.0
  %609 = vmatpush.msra.mxu0 %v594
  %610 = vmatpush.msra.mxu0 %v593
  %611 = vmatpush.msra.mxu0 %v592
  %612 = vmatpush.msra.mxu0 %v591
  %613 = vmatpush.msra.mxu0 %v590
  %614 = vmatpush.msra.mxu0 %v589
  %615 = vmatmul.f32.gmra.mxu0 %v597
  %v616 = vpop.f32.mrf.mxu0
  %v617 = vadd.f32 0.0, %v616
  %618 = vdwg.mxu0
  %v620 = vsel %vm595, %v588, 0
  %622 = vmatpush.msra.mxu0 0.0
  %623 = vmatpush.msra.mxu0 0.0
  %624 = vmatpush.msra.mxu0 0.0
  %625 = vmatpush.msra.mxu0 0.0
  %626 = vmatpush.msra.mxu0 0.0
  %627 = vmatpush.msra.mxu0 0.0
  %628 = vmatpush.msra.mxu0 0.0
  %629 = vmatpush.msra.mxu0 0.0
  %630 = vmatpush.msra.mxu0 0.0
  %631 = vmatpush.msra.mxu0 0.0
  %632 = vmatpush.msra.mxu0 %v594
  %633 = vmatpush.msra.mxu0 %v593
  %634 = vmatpush.msra.mxu0 %v592
  %635 = vmatpush.msra.mxu0 %v591
  %636 = vmatpush.msra.mxu0 %v590
  %637 = vmatpush.msra.mxu0 %v589
  %638 = vmatmul.f32.gmra.mxu0 %v620
  %v639 = vpop.f32.mrf.mxu0
  %v640 = vadd.f32 0.0, %v639
  %641 = vdwg.mxu0
  %v642 = vmul.f32 %v617, %v617
  %v643 = vsub.f32 %v640, %v642
  %v644 = vmax.f32 %v643, 0.0
  %v645 = vadd.f32 %v644, 1e-05
  %v646 = vrsqrt.pop %v645
  %v647 = vmul.f32 %v646, %v645
  %v648 = vmul.f32 %v647, %v646
  %v649 = vmul.f32 0.5, %v648
  %v650 = vsub.f32 1.5, %v649
  %v651 = vmul.f32 %v646, %v650
  %vm652 = vweird.f32 %v645
  %vm653 = vweird.f32 %v646
  %vm654 = vmor %vm652, %vm653
  %v655 = vsel %vm654, %v646, %v651
  %v656 = vmul.f32 %v571, %v655
  %v657 = vmul.f32 %v617, %v656
  %v658 = vsub.f32 %v572, %v657
  %v659 = vperm.slane %v656, 0
  %v660 = vmul.f32 %v569, %v659
  %v661 = vperm.slane %v658, 0
  %v662 = vadd.f32 %v660, %v661
  %v663 = vmax.f32 %v662, 0.0
  %v664 = vld [vmem:[%s3] sm:$0xff]
  %v665 = vld [vmem:[%s3 + $0x8] sm:$0xff]
  %v666 = vld [vmem:[%s3 + $0x10] sm:$0xff]
  %v667 = vld [vmem:[%s3 + $0x18] sm:$0xff]
  %v668 = vld [vmem:[%s3 + $0x20] sm:$0xff]
  %v669 = vld [vmem:[%s3 + $0x28] sm:$0xff]
  %v670 = vld [vmem:[%s3 + $0x30] sm:$0xff]
  %v671 = vld [vmem:[%s3 + $0x38] sm:$0xff]
  %v672 = vld [vmem:[%s3 + $0x40] sm:$0xff]
  %v673 = vld [vmem:[%s3 + $0x48] sm:$0xff]
  %v674 = vld [vmem:[%s3 + $0x50] sm:$0xff]
  %v675 = vld [vmem:[%s3 + $0x58] sm:$0xff]
  %s676 = scalar_lea.vmem %s5, 3
  %v677 = vld [vmem:[%s676] ss:$4 sm:$0x3]
  %v679 = vperm.slane %v677, 0
  %v680 = vperm.slane %v677, 1
  %v684 = vsel %vm595, %v663, 0
  %686 = vmatpush.msra.mxu0 0.0
  %687 = vmatpush.msra.mxu0 0.0
  %688 = vmatpush.msra.mxu0 0.0
  %689 = vmatpush.msra.mxu0 0.0
  %690 = vmatpush.msra.mxu0 0.0
  %691 = vmatpush.msra.mxu0 0.0
  %692 = vmatpush.msra.mxu0 0.0
  %693 = vmatpush.msra.mxu0 0.0
  %694 = vmatpush.msra.mxu0 0.0
  %695 = vmatpush.msra.mxu0 0.0
  %696 = vmatpush.msra.mxu0 %v674
  %697 = vmatpush.msra.mxu0 %v672
  %698 = vmatpush.msra.mxu0 %v670
  %699 = vmatpush.msra.mxu0 %v668
  %700 = vmatpush.msra.mxu0 %v666
  %701 = vmatpush.msra.mxu0 %v664
  %702 = vmatmul.f32.gmra.mxu0 %v684
  %v703 = vpop.f32.mrf.mxu0
  %v704 = vadd.f32 %v679, %v703
  %705 = vdwg.mxu0
  %706 = vmatpush.msra.mxu0 0.0
  %707 = vmatpush.msra.mxu0 0.0
  %708 = vmatpush.msra.mxu0 0.0
  %709 = vmatpush.msra.mxu0 0.0
  %710 = vmatpush.msra.mxu0 0.0
  %711 = vmatpush.msra.mxu0 0.0
  %712 = vmatpush.msra.mxu0 0.0
  %713 = vmatpush.msra.mxu0 0.0
  %714 = vmatpush.msra.mxu0 0.0
  %715 = vmatpush.msra.mxu0 0.0
  %716 = vmatpush.msra.mxu0 %v675
  %717 = vmatpush.msra.mxu0 %v673
  %718 = vmatpush.msra.mxu0 %v671
  %719 = vmatpush.msra.mxu0 %v669
  %720 = vmatpush.msra.mxu0 %v667
  %721 = vmatpush.msra.mxu0 %v665
  %722 = vmatmul.f32.gmra.mxu0 %v684
  %v723 = vpop.f32.mrf.mxu0
  %v724 = vadd.f32 %v680, %v723
  %725 = vdwg.mxu0
  %v726 = vmax.f32 %v704, 0.0
  %v727 = vmax.f32 %v724, 0.0
  %v728 = vld [vmem:[%s4] sm:$0xff]
  %v729 = vld [vmem:[%s4 + $0x8] sm:$0xff]
  %v730 = vld [vmem:[%s4 + $0x10] sm:$0xff]
  %v731 = vld [vmem:[%s4 + $0x18] sm:$0xff]
  %v732 = vld [vmem:[%s4 + $0x20] sm:$0xff]
  %v733 = vld [vmem:[%s4 + $0x28] sm:$0xff]
  %v734 = vld [vmem:[%s4 + $0x30] sm:$0xff]
  %v735 = vld [vmem:[%s4 + $0x38] sm:$0xff]
  %v736 = vld [vmem:[%s4 + $0x40] sm:$0xff]
  %v737 = vld [vmem:[%s4 + $0x48] sm:$0xff]
  %v738 = vld [vmem:[%s4 + $0x50] sm:$0xff]
  %v739 = vld [vmem:[%s4 + $0x58] sm:$0xff]
  %v740 = vld [vmem:[%s4 + $0x60] sm:$0xff]
  %v741 = vld [vmem:[%s4 + $0x68] sm:$0xff]
  %v742 = vld [vmem:[%s4 + $0x70] sm:$0xff]
  %v743 = vld [vmem:[%s4 + $0x78] sm:$0xff]
  %v744 = vld [vmem:[%s4 + $0x80] sm:$0xff]
  %v745 = vld [vmem:[%s4 + $0x88] sm:$0xff]
  %v746 = vld [vmem:[%s4 + $0x90] sm:$0xff]
  %v747 = vld [vmem:[%s4 + $0x98] sm:$0xff]
  %v748 = vld [vmem:[%s4 + $0xa0] sm:$0xff]
  %v749 = vld [vmem:[%s4 + $0xa8] sm:$0xff]
  %v750 = vld [vmem:[%s4 + $0xb0] sm:$0xff]
  %v751 = vld [vmem:[%s4 + $0xb8] sm:$0xff]
  %v752 = vld [vmem:[%s4 + $0xc0] sm:$0xff]
  %v753 = vld [vmem:[%s4 + $0xc8] sm:$0xff]
  %v754 = vld [vmem:[%s4 + $0xd0] sm:$0xff]
  %v755 = vld [vmem:[%s4 + $0xd8] sm:$0xff]
  %v756 = vld [vmem:[%s4 + $0xe0] sm:$0xff]
  %v757 = vld [vmem:[%s4 + $0xe8] sm:$0xff]
  %v758 = vld [vmem:[%s4 + $0xf0] sm:$0xff]
  %v759 = vld [vmem:[%s4 + $0xf8] sm:$0xff]
  %v760 = vld [vmem:[%s4 + $0x100] sm:$0xff]
  %v761 = vld [vmem:[%s4 + $0x108] sm:$0xff]
  %v762 = vld [vmem:[%s4 + $0x110] sm:$0xff]
  %v763 = vld [vmem:[%s4 + $0x118] sm:$0xff]
  %v764 = vld [vmem:[%s4 + $0x120] sm:$0xff]
  %v765 = vld [vmem:[%s4 + $0x128] sm:$0xff]
  %v766 = vld [vmem:[%s4 + $0x130] sm:$0xff]
  %v767 = vld [vmem:[%s4 + $0x138] sm:$0xff]
  %v768 = vld [vmem:[%s4 + $0x140] sm:$0xff]
  %v769 = vld [vmem:[%s4 + $0x148] sm:$0xff]
  %v770 = vld [vmem:[%s4 + $0x150] sm:$0xff]
  %v771 = vld [vmem:[%s4 + $0x158] sm:$0xff]
  %v772 = vld [vmem:[%s4 + $0x160] sm:$0xff]
  %v773 = vld [vmem:[%s4 + $0x168] sm:$0xff]
  %v774 = vld [vmem:[%s4 + $0x170] sm:$0xff]
  %v775 = vld [vmem:[%s4 + $0x178] sm:$0xff]
  %v776 = vld [vmem:[%s4 + $0x180] sm:$0xff]
  %v777 = vld [vmem:[%s4 + $0x188] sm:$0xff]
  %v778 = vld [vmem:[%s4 + $0x190] sm:$0xff]
  %v779 = vld [vmem:[%s4 + $0x198] sm:$0xff]
  %v780 = vld [vmem:[%s4 + $0x1a0] sm:$0xff]
  %v781 = vld [vmem:[%s4 + $0x1a8] sm:$0xff]
  %v782 = vld [vmem:[%s4 + $0x1b0] sm:$0xff]
  %v783 = vld [vmem:[%s4 + $0x1b8] sm:$0xff]
  %v784 = vld [vmem:[%s4 + $0x1c0] sm:$0xff]
  %v785 = vld [vmem:[%s4 + $0x1c8] sm:$0xff]
  %v786 = vld [vmem:[%s4 + $0x1d0] sm:$0xff]
  %v787 = vld [vmem:[%s4 + $0x1d8] sm:$0xff]
  %v788 = vld [vmem:[%s4 + $0x1e0] sm:$0xff]
  %v789 = vld [vmem:[%s4 + $0x1e8] sm:$0xff]
  %v790 = vld [vmem:[%s4 + $0x1f0] sm:$0xff]
  %v791 = vld [vmem:[%s4 + $0x1f8] sm:$0xff]
  %v792 = vld [vmem:[%s4 + $0x200] sm:$0xff]
  %v793 = vld [vmem:[%s4 + $0x208] sm:$0xff]
  %v794 = vld [vmem:[%s4 + $0x210] sm:$0xff]
  %v795 = vld [vmem:[%s4 + $0x218] sm:$0xff]
  %v796 = vld [vmem:[%s4 + $0x220] sm:$0xff]
  %v797 = vld [vmem:[%s4 + $0x228] sm:$0xff]
  %v798 = vld [vmem:[%s4 + $0x230] sm:$0xff]
  %v799 = vld [vmem:[%s4 + $0x238] sm:$0xff]
  %v800 = vld [vmem:[%s4 + $0x240] sm:$0xff]
  %v801 = vld [vmem:[%s4 + $0x248] sm:$0xff]
  %v802 = vld [vmem:[%s4 + $0x250] sm:$0xff]
  %v803 = vld [vmem:[%s4 + $0x258] sm:$0xff]
  %v804 = vld [vmem:[%s4 + $0x260] sm:$0xff]
  %v805 = vld [vmem:[%s4 + $0x268] sm:$0xff]
  %v806 = vld [vmem:[%s4 + $0x270] sm:$0xff]
  %v807 = vld [vmem:[%s4 + $0x278] sm:$0xff]
  %v808 = vld [vmem:[%s4 + $0x280] sm:$0xff]
  %v809 = vld [vmem:[%s4 + $0x288] sm:$0xff]
  %v810 = vld [vmem:[%s4 + $0x290] sm:$0xff]
  %v811 = vld [vmem:[%s4 + $0x298] sm:$0xff]
  %v812 = vld [vmem:[%s4 + $0x2a0] sm:$0xff]
  %v813 = vld [vmem:[%s4 + $0x2a8] sm:$0xff]
  %v814 = vld [vmem:[%s4 + $0x2b0] sm:$0xff]
  %v815 = vld [vmem:[%s4 + $0x2b8] sm:$0xff]
  %v816 = vld [vmem:[%s4 + $0x2c0] sm:$0xff]
  %v817 = vld [vmem:[%s4 + $0x2c8] sm:$0xff]
  %v818 = vld [vmem:[%s4 + $0x2d0] sm:$0xff]
  %v819 = vld [vmem:[%s4 + $0x2d8] sm:$0xff]
  %v820 = vld [vmem:[%s4 + $0x2e0] sm:$0xff]
  %v821 = vld [vmem:[%s4 + $0x2e8] sm:$0xff]
  %v822 = vld [vmem:[%s4 + $0x2f0] sm:$0xff]
  %v823 = vld [vmem:[%s4 + $0x2f8] sm:$0xff]
  %v824 = vld [vmem:[%s7] sm:$0xf]
  %v826 = vperm.slane %v824, 0
  %v827 = vperm.slane %v824, 1
  %v828 = vperm.slane %v824, 2
  %v829 = vperm.slane %v824, 3
  %v835 = vsel %vm276, %v727, 0
  %837 = vmatpush.msra.mxu0 %v788
  %838 = vmatpush.msra.mxu0 %v784
  %839 = vmatpush.msra.mxu0 %v780
  %840 = vmatpush.msra.mxu0 %v776
  %841 = vmatpush.msra.mxu0 %v772
  %842 = vmatpush.msra.mxu0 %v768
  %843 = vmatpush.msra.mxu0 %v764
  %844 = vmatpush.msra.mxu0 %v760
  %845 = vmatpush.msra.mxu0 %v756
  %846 = vmatpush.msra.mxu0 %v752
  %847 = vmatpush.msra.mxu0 %v748
  %848 = vmatpush.msra.mxu0 %v744
  %849 = vmatpush.msra.mxu0 %v740
  %850 = vmatpush.msra.mxu0 %v736
  %851 = vmatpush.msra.mxu0 %v732
  %852 = vmatpush.msra.mxu0 %v728
  %853 = vmatmul.f32.gmra.mxu0 %v726
  %v854 = vpop.f32.mrf.mxu0
  %v855 = vadd.f32 %v826, %v854
  %856 = vdwg.mxu0
  %857 = vmatpush.msra.mxu0 0.0
  %858 = vmatpush.msra.mxu0 0.0
  %859 = vmatpush.msra.mxu0 0.0
  %860 = vmatpush.msra.mxu0 0.0
  %861 = vmatpush.msra.mxu0 0.0
  %862 = vmatpush.msra.mxu0 0.0
  %863 = vmatpush.msra.mxu0 0.0
  %864 = vmatpush.msra.mxu0 0.0
  %865 = vmatpush.msra.mxu0 %v820
  %866 = vmatpush.msra.mxu0 %v816
  %867 = vmatpush.msra.mxu0 %v812
  %868 = vmatpush.msra.mxu0 %v808
  %869 = vmatpush.msra.mxu0 %v804
  %870 = vmatpush.msra.mxu0 %v800
  %871 = vmatpush.msra.mxu0 %v796
  %872 = vmatpush.msra.mxu0 %v792
  %873 = vmatmul.f32.gmra.mxu0 %v835
  %v874 = vpop.f32.mrf.mxu0
  %v875 = vadd.f32 %v855, %v874
  %876 = vdwg.mxu0
  %877 = vmatpush.msra.mxu0 %v789
  %878 = vmatpush.msra.mxu0 %v785
  %879 = vmatpush.msra.mxu0 %v781
  %880 = vmatpush.msra.mxu0 %v777
  %881 = vmatpush.msra.mxu0 %v773
  %882 = vmatpush.msra.mxu0 %v769
  %883 = vmatpush.msra.mxu0 %v765
  %884 = vmatpush.msra.mxu0 %v761
  %885 = vmatpush.msra.mxu0 %v757
  %886 = vmatpush.msra.mxu0 %v753
  %887 = vmatpush.msra.mxu0 %v749
  %888 = vmatpush.msra.mxu0 %v745
  %889 = vmatpush.msra.mxu0 %v741
  %890 = vmatpush.msra.mxu0 %v737
  %891 = vmatpush.msra.mxu0 %v733
  %892 = vmatpush.msra.mxu0 %v729
  %893 = vmatmul.f32.gmra.mxu0 %v726
  %v894 = vpop.f32.mrf.mxu0
  %v895 = vadd.f32 %v827, %v894
  %896 = vdwg.mxu0
  %897 = vmatpush.msra.mxu0 0.0
  %898 = vmatpush.msra.mxu0 0.0
  %899 = vmatpush.msra.mxu0 0.0
  %900 = vmatpush.msra.mxu0 0.0
  %901 = vmatpush.msra.mxu0 0.0
  %902 = vmatpush.msra.mxu0 0.0
  %903 = vmatpush.msra.mxu0 0.0
  %904 = vmatpush.msra.mxu0 0.0
  %905 = vmatpush.msra.mxu0 %v821
  %906 = vmatpush.msra.mxu0 %v817
  %907 = vmatpush.msra.mxu0 %v813
  %908 = vmatpush.msra.mxu0 %v809
  %909 = vmatpush.msra.mxu0 %v805
  %910 = vmatpush.msra.mxu0 %v801
  %911 = vmatpush.msra.mxu0 %v797
  %912 = vmatpush.msra.mxu0 %v793
  %913 = vmatmul.f32.gmra.mxu0 %v835
  %v914 = vpop.f32.mrf.mxu0
  %v915 = vadd.f32 %v895, %v914
  %916 = vdwg.mxu0
  %917 = vmatpush.msra.mxu0 %v790
  %918 = vmatpush.msra.mxu0 %v786
  %919 = vmatpush.msra.mxu0 %v782
  %920 = vmatpush.msra.mxu0 %v778
  %921 = vmatpush.msra.mxu0 %v774
  %922 = vmatpush.msra.mxu0 %v770
  %923 = vmatpush.msra.mxu0 %v766
  %924 = vmatpush.msra.mxu0 %v762
  %925 = vmatpush.msra.mxu0 %v758
  %926 = vmatpush.msra.mxu0 %v754
  %927 = vmatpush.msra.mxu0 %v750
  %928 = vmatpush.msra.mxu0 %v746
  %929 = vmatpush.msra.mxu0 %v742
  %930 = vmatpush.msra.mxu0 %v738
  %931 = vmatpush.msra.mxu0 %v734
  %932 = vmatpush.msra.mxu0 %v730
  %933 = vmatmul.f32.gmra.mxu0 %v726
  %v934 = vpop.f32.mrf.mxu0
  %v935 = vadd.f32 %v828, %v934
  %936 = vdwg.mxu0
  %937 = vmatpush.msra.mxu0 0.0
  %938 = vmatpush.msra.mxu0 0.0
  %939 = vmatpush.msra.mxu0 0.0
  %940 = vmatpush.msra.mxu0 0.0
  %941 = vmatpush.msra.mxu0 0.0
  %942 = vmatpush.msra.mxu0 0.0
  %943 = vmatpush.msra.mxu0 0.0
  %944 = vmatpush.msra.mxu0 0.0
  %945 = vmatpush.msra.mxu0 %v822
  %946 = vmatpush.msra.mxu0 %v818
  %947 = vmatpush.msra.mxu0 %v814
  %948 = vmatpush.msra.mxu0 %v810
  %949 = vmatpush.msra.mxu0 %v806
  %950 = vmatpush.msra.mxu0 %v802
  %951 = vmatpush.msra.mxu0 %v798
  %952 = vmatpush.msra.mxu0 %v794
  %953 = vmatmul.f32.gmra.mxu0 %v835
  %v954 = vpop.f32.mrf.mxu0
  %v955 = vadd.f32 %v935, %v954
  %956 = vdwg.mxu0
  %957 = vmatpush.msra.mxu0 %v791
  %958 = vmatpush.msra.mxu0 %v787
  %959 = vmatpush.msra.mxu0 %v783
  %960 = vmatpush.msra.mxu0 %v779
  %961 = vmatpush.msra.mxu0 %v775
  %962 = vmatpush.msra.mxu0 %v771
  %963 = vmatpush.msra.mxu0 %v767
  %964 = vmatpush.msra.mxu0 %v763
  %965 = vmatpush.msra.mxu0 %v759
  %966 = vmatpush.msra.mxu0 %v755
  %967 = vmatpush.msra.mxu0 %v751
  %968 = vmatpush.msra.mxu0 %v747
  %969 = vmatpush.msra.mxu0 %v743
  %970 = vmatpush.msra.mxu0 %v739
  %971 = vmatpush.msra.mxu0 %v735
  %972 = vmatpush.msra.mxu0 %v731
  %973 = vmatmul.f32.gmra.mxu0 %v726
  %v974 = vpop.f32.mrf.mxu0
  %v975 = vadd.f32 %v829, %v974
  %976 = vdwg.mxu0
  %977 = vmatpush.msra.mxu0 0.0
  %978 = vmatpush.msra.mxu0 0.0
  %979 = vmatpush.msra.mxu0 0.0
  %980 = vmatpush.msra.mxu0 0.0
  %981 = vmatpush.msra.mxu0 0.0
  %982 = vmatpush.msra.mxu0 0.0
  %983 = vmatpush.msra.mxu0 0.0
  %984 = vmatpush.msra.mxu0 0.0
  %985 = vmatpush.msra.mxu0 %v823
  %986 = vmatpush.msra.mxu0 %v819
  %987 = vmatpush.msra.mxu0 %v815
  %988 = vmatpush.msra.mxu0 %v811
  %989 = vmatpush.msra.mxu0 %v807
  %990 = vmatpush.msra.mxu0 %v803
  %991 = vmatpush.msra.mxu0 %v799
  %992 = vmatpush.msra.mxu0 %v795
  %993 = vmatmul.f32.gmra.mxu0 %v835
  %v994 = vpop.f32.mrf.mxu0
  %v995 = vadd.f32 %v975, %v994
  %996 = vdwg.mxu0
  %v997 = vmax.f32 %v875, 0.0
  %v998 = vmax.f32 %v915, 0.0
  %v999 = vmax.f32 %v955, 0.0
  %v1000 = vmax.f32 %v995, 0.0
  %v1005 = vrot.slane %v998, 6
  %v1006 = vrot.slane %v999, 4
  %v1007 = vrot.slane %v1000, 2
  %v1008 = vsel %vm196, %v997, %v1005
  %vm1009 = vcmask 1045508
  %v1010 = vsel %vm1009, %v1006, %v1007
  %vm1011 = vcmask 1043456
  %v1012 = vsel %vm1011, %v1008, %v1010
  %1014 = vst [vmem:[%s10] sm:$0xff] %v1012
  // Predicated region
  $region42: #{net_forward.1} parent=0 // pred_check
    _
  $region43: #{net_forward.1} parent=0 // pred_check_branch
    %1016 = sbr.rel (0) target = $region45
  $region44: #{net_forward.1} parent=0 // pred_region
    _
  $region45: #{net_forward.1} parent=0 // pred_fallthru
    _
  // Predicated region
  $region46: #{net_forward.1} parent=0 // pred_check
    _
  $region47: #{net_forward.1} parent=0 // pred_check_branch
    %1018 = sbr.rel (0) target = $region49
  $region48: #{net_forward.1} parent=0 // pred_region
    _
  $region49: #{net_forward.1} parent=0 // pred_fallthru
    _

</llo_original>
